<compile_context>
chip_gen: v7x
topology: tpu7x:2x2x1
jax: 0.10.0
libtpu: 0.0.40
codegen_flags: <defaults>
</compile_context>

<pallas_src>
import functools
import itertools

import jax
import jax.numpy as jnp
import numpy as np
from jax.experimental import pallas as pl
from jax.experimental.pallas import tpu as pltpu

EPS = float(np.finfo(np.float32).eps)  # torch.finfo(torch.float32).eps


def _round_up(x, m):
    return ((x + m - 1) // m) * m


def _pairwise_sisnr_kernel(pred_ref, src_ref, out_ref, *, S, T):
    # pred_ref / src_ref blocks: (Bt, S*T) lane-dense; out_ref block: (Bt, S*S).
    # Per-batch-element math is independent, so garbage rows from a ragged last
    # block only produce garbage output rows, which Pallas discards on writeback.
    ps, ts, e_ps, e_ts = [], [], [], []
    for s in range(S):
        # Static lane slices (zero-cost views when T is a multiple of 128).
        x = pred_ref[:, s * T:(s + 1) * T].astype(jnp.float32)        # (Bt, T)
        x = x - jnp.mean(x, axis=-1, keepdims=True)                   # zero-mean over time
        ps.append(x)
        e_ps.append(jnp.sum(x * x, axis=-1, keepdims=True))           # (Bt, 1) ||pred_s||^2
        y = src_ref[:, s * T:(s + 1) * T].astype(jnp.float32)
        y = y - jnp.mean(y, axis=-1, keepdims=True)
        ts.append(y)
        e_ts.append(jnp.sum(y * y, axis=-1, keepdims=True))           # (Bt, 1) ||tgt_s||^2

    cols = []
    for i in range(S):          # prediction speaker
        for j in range(S):      # target speaker
            # VPU multiply + lane reduction; no MXU, no transposes.
            dot = jnp.sum(ps[i] * ts[j], axis=-1, keepdims=True)      # (Bt, 1)
            alpha = (dot + EPS) / (e_ts[j] + EPS)
            e_scaled = alpha * alpha * e_ts[j]                        # ||alpha*t||^2
            e_noise = e_scaled - 2.0 * alpha * dot + e_ps[i]          # ||alpha*t - p||^2
            e_noise = jnp.maximum(e_noise, 0.0)                       # cancellation guard
            cols.append(10.0 * jnp.log10((e_scaled + EPS) / (e_noise + EPS)))

    out_ref[...] = jnp.concatenate(cols, axis=-1).astype(out_ref.dtype)  # (Bt, S*S)


def _vmem_budget():
    """(block budget bytes, vmem_limit_bytes) derived from the chip's real VMEM size."""
    try:
        cap = int(pltpu.get_tpu_info().vmem_capacity_bytes)
    except Exception:
        cap = 64 * 1024 * 1024  # conservative fallback (v7x-sized VMEM)
    budget = (cap * 2) // 5                                  # ~40% for accounted blocks+temps
    limit = min((cap * 3) // 4, cap - 8 * 1024 * 1024)       # headroom for compiler scratch
    return budget, limit


def _choose_batch_tile(B, S, T, budget_bytes):
    """Largest Bt whose true ((8,128)-padded) VMEM footprint fits the budget."""
    lane_in = _round_up(S * T, 128)
    lane_out = _round_up(S * S, 128)
    # Honest per-batch-element bytes resident in VMEM:
    #   inputs : 2 arrays x 2 pipeline buffers x lane_in x 4B
    #   temps  : 2 zero-meaned f32 working copies x lane_in x 4B
    #   output : 2 pipeline buffers x lane_out x 4B
    per_elem = (2 * 2 + 2) * lane_in * 4 + 2 * lane_out * 4
    bt = max(1, int(budget_bytes) // per_elem)
    if B >= 16:
        # Keep >= 2 grid steps: shards the "parallel" axis across v7x's two TensorCores
        # and lets input DMA overlap compute on single-TC chips.
        bt = min(bt, B // 2)
    bt = min(bt, B)
    if bt < B:
        bt = (bt // 8) * 8          # sublane-aligned partial blocks (8,128 rule)
        if bt == 0:
            bt = min(B, 8)
    return bt


def pairwise_sisnr(predict, source, *, batch_tile=None):
    """Returns (B, n_spk, n_spk) matrix M[b, i, j] = SI-SNR(predict[b, i], source[b, j])."""
    B, S, T = predict.shape
    assert source.shape == predict.shape
    # Free, contiguous reshapes to a lane-dense 2D layout.
    pred2 = predict.reshape(B, S * T)
    src2 = source.reshape(B, S * T)

    budget, vmem_limit = _vmem_budget()
    Bt = batch_tile if batch_tile is not None else _choose_batch_tile(B, S, T, budget)
    nb = pl.cdiv(B, Bt)  # ragged last block is masked by Pallas

    kernel = functools.partial(_pairwise_sisnr_kernel, S=S, T=T)
    in_bytes = int(predict.dtype.itemsize)
    out = pl.pallas_call(
        kernel,
        out_shape=jax.ShapeDtypeStruct((B, S * S), jnp.float32),
        grid_spec=pl.GridSpec(
            grid=(nb,),
            in_specs=[
                pl.BlockSpec((Bt, S * T), lambda b: (b, 0)),
                pl.BlockSpec((Bt, S * T), lambda b: (b, 0)),
            ],
            out_specs=pl.BlockSpec((Bt, S * S), lambda b: (b, 0)),
        ),
        compiler_params=pltpu.CompilerParams(
            dimension_semantics=("parallel",),   # sharded across both TCs on v7x
            vmem_limit_bytes=int(vmem_limit),
        ),
        cost_estimate=pl.CostEstimate(
            flops=int(2 * B * S * T * (3 + S)),
            transcendentals=int(B * S * S),
            bytes_accessed=int(2 * B * S * T * in_bytes + B * S * S * 4),
        ),
    )(pred2, src2)
    return out.reshape(B, S, S)


def pit_loss(source, predict):
    """PIT forward: dict(loss = mean_b max_perm mean_s SI-SNR(pred[perm[s]], source[s]))."""
    B, S, T = source.shape
    mtx = pairwise_sisnr(predict, source)                              # (B, S_pred, S_tgt)

    # Exhaustive permutation search (glue; n_spk! is tiny).
    perms = jnp.array(list(itertools.permutations(range(S))), dtype=jnp.int32)  # (P, S)
    vals = mtx[:, perms, jnp.arange(S)]                                # (B, P, S)
    metric_per_perm = vals.mean(axis=-1)                               # (B, P)
    best = metric_per_perm.max(axis=-1)                                # (B,)
    return {"loss": best.mean()}


def _reference_pit_loss(source, predict):
    """Pure-JAX reference matching torchmetrics semantics (no MXU, exact f32 sums)."""
    p = predict - predict.mean(axis=-1, keepdims=True)
    t = source - source.mean(axis=-1, keepdims=True)
    dot = jnp.sum(p[:, :, None, :] * t[:, None, :, :], axis=-1)        # (B, S, S)
    e_t = jnp.sum(t * t, axis=-1)[:, None, :]
    e_p = jnp.sum(p * p, axis=-1)[:, :, None]
    alpha = (dot + EPS) / (e_t + EPS)
    e_scaled = alpha * alpha * e_t
    e_noise = jnp.maximum(e_scaled - 2.0 * alpha * dot + e_p, 0.0)
    mtx = 10.0 * jnp.log10((e_scaled + EPS) / (e_noise + EPS))
    S = source.shape[1]
    perms = jnp.array(list(itertools.permutations(range(S))), dtype=jnp.int32)
    vals = mtx[:, perms, jnp.arange(S)]
    return vals.mean(-1).max(-1).mean()


if __name__ == "__main__":
    B, n_spk, T = 2, 2, 256
    key = jax.random.PRNGKey(0)
    k1, k2 = jax.random.split(key, 2)
    source = jax.random.normal(k1, (B, n_spk, T), dtype=jnp.float32)
    # predictions = noisy, scaled, speaker-shuffled version of the sources
    predict = 0.7 * jnp.flip(source, axis=1) + 0.3 * jax.random.normal(
        k2, (B, n_spk, T), dtype=jnp.float32
    )

    out = pit_loss(source, predict)
    loss = jax.block_until_ready(out["loss"])

    ref = _reference_pit_loss(source, predict)
    np.testing.assert_allclose(np.asarray(loss), np.asarray(ref), rtol=1e-4, atol=1e-4)

    print("KERNEL_OK")
</pallas_src>

<mosaic_0001>
module attributes {stable_mosaic.version = 11 : i64} {
  func.func @_pairwise_sisnr_kernel(%arg0: i32, %arg1: memref<2x512xf32, #tpu.memory_space<vmem>>, %arg2: memref<2x512xf32, #tpu.memory_space<vmem>>, %arg3: memref<2x4xf32, #tpu.memory_space<vmem>>) attributes {dimension_semantics = [#tpu.dimension_semantics<parallel>], iteration_bounds = array<i64: 1>, scalar_prefetch = 0 : i64, scratch_operands = 0 : i64, tpu.core_type = #tpu.core_type<tc>, window_params = [{transform_indices = @transform_0, window_bounds = array<i64: 2, 512>}, {transform_indices = @transform_1, window_bounds = array<i64: 2, 512>}, {transform_indices = @transform_2, window_bounds = array<i64: 2, 4>}]} {
    %c0 = arith.constant 0 : index
    %c0_0 = arith.constant 0 : index
    %0 = vector.load %arg1[%c0, %c0_0] : memref<2x512xf32, #tpu.memory_space<vmem>>, vector<2x256xf32>
    %cst = arith.constant dense<0.000000e+00> : vector<2xf32>
    %1 = vector.multi_reduction <add>, %0, %cst [1] : vector<2x256xf32> to vector<2xf32>
    %2 = vector.shape_cast %1 : vector<2xf32> to vector<2x1xf32>
    %cst_1 = arith.constant 2.560000e+02 : f32
    %3 = vector.broadcast %cst_1 : f32 to vector<2x1xf32>
    %4 = arith.divf %2, %3 : vector<2x1xf32>
    %5 = vector.broadcast %4 : vector<2x1xf32> to vector<2x256xf32>
    %6 = arith.subf %0, %5 : vector<2x256xf32>
    %7 = arith.mulf %6, %6 : vector<2x256xf32>
    %cst_2 = arith.constant dense<0.000000e+00> : vector<2xf32>
    %8 = vector.multi_reduction <add>, %7, %cst_2 [1] : vector<2x256xf32> to vector<2xf32>
    %9 = vector.shape_cast %8 : vector<2xf32> to vector<2x1xf32>
    %c0_3 = arith.constant 0 : index
    %c0_4 = arith.constant 0 : index
    %10 = vector.load %arg2[%c0_3, %c0_4] : memref<2x512xf32, #tpu.memory_space<vmem>>, vector<2x256xf32>
    %cst_5 = arith.constant dense<0.000000e+00> : vector<2xf32>
    %11 = vector.multi_reduction <add>, %10, %cst_5 [1] : vector<2x256xf32> to vector<2xf32>
    %12 = vector.shape_cast %11 : vector<2xf32> to vector<2x1xf32>
    %cst_6 = arith.constant 2.560000e+02 : f32
    %13 = vector.broadcast %cst_6 : f32 to vector<2x1xf32>
    %14 = arith.divf %12, %13 : vector<2x1xf32>
    %15 = vector.broadcast %14 : vector<2x1xf32> to vector<2x256xf32>
    %16 = arith.subf %10, %15 : vector<2x256xf32>
    %17 = arith.mulf %16, %16 : vector<2x256xf32>
    %cst_7 = arith.constant dense<0.000000e+00> : vector<2xf32>
    %18 = vector.multi_reduction <add>, %17, %cst_7 [1] : vector<2x256xf32> to vector<2xf32>
    %19 = vector.shape_cast %18 : vector<2xf32> to vector<2x1xf32>
    %c0_8 = arith.constant 0 : index
    %c256 = arith.constant 256 : index
    %20 = vector.load %arg1[%c0_8, %c256] : memref<2x512xf32, #tpu.memory_space<vmem>>, vector<2x256xf32>
    %cst_9 = arith.constant dense<0.000000e+00> : vector<2xf32>
    %21 = vector.multi_reduction <add>, %20, %cst_9 [1] : vector<2x256xf32> to vector<2xf32>
    %22 = vector.shape_cast %21 : vector<2xf32> to vector<2x1xf32>
    %cst_10 = arith.constant 2.560000e+02 : f32
    %23 = vector.broadcast %cst_10 : f32 to vector<2x1xf32>
    %24 = arith.divf %22, %23 : vector<2x1xf32>
    %25 = vector.broadcast %24 : vector<2x1xf32> to vector<2x256xf32>
    %26 = arith.subf %20, %25 : vector<2x256xf32>
    %27 = arith.mulf %26, %26 : vector<2x256xf32>
    %cst_11 = arith.constant dense<0.000000e+00> : vector<2xf32>
    %28 = vector.multi_reduction <add>, %27, %cst_11 [1] : vector<2x256xf32> to vector<2xf32>
    %29 = vector.shape_cast %28 : vector<2xf32> to vector<2x1xf32>
    %c0_12 = arith.constant 0 : index
    %c256_13 = arith.constant 256 : index
    %30 = vector.load %arg2[%c0_12, %c256_13] : memref<2x512xf32, #tpu.memory_space<vmem>>, vector<2x256xf32>
    %cst_14 = arith.constant dense<0.000000e+00> : vector<2xf32>
    %31 = vector.multi_reduction <add>, %30, %cst_14 [1] : vector<2x256xf32> to vector<2xf32>
    %32 = vector.shape_cast %31 : vector<2xf32> to vector<2x1xf32>
    %cst_15 = arith.constant 2.560000e+02 : f32
    %33 = vector.broadcast %cst_15 : f32 to vector<2x1xf32>
    %34 = arith.divf %32, %33 : vector<2x1xf32>
    %35 = vector.broadcast %34 : vector<2x1xf32> to vector<2x256xf32>
    %36 = arith.subf %30, %35 : vector<2x256xf32>
    %37 = arith.mulf %36, %36 : vector<2x256xf32>
    %cst_16 = arith.constant dense<0.000000e+00> : vector<2xf32>
    %38 = vector.multi_reduction <add>, %37, %cst_16 [1] : vector<2x256xf32> to vector<2xf32>
    %39 = vector.shape_cast %38 : vector<2xf32> to vector<2x1xf32>
    %40 = arith.mulf %6, %16 : vector<2x256xf32>
    %cst_17 = arith.constant dense<0.000000e+00> : vector<2xf32>
    %41 = vector.multi_reduction <add>, %40, %cst_17 [1] : vector<2x256xf32> to vector<2xf32>
    %42 = vector.shape_cast %41 : vector<2xf32> to vector<2x1xf32>
    %cst_18 = arith.constant 1.1920929E-7 : f32
    %43 = vector.broadcast %cst_18 : f32 to vector<2x1xf32>
    %44 = arith.addf %42, %43 : vector<2x1xf32>
    %cst_19 = arith.constant 1.1920929E-7 : f32
    %45 = vector.broadcast %cst_19 : f32 to vector<2x1xf32>
    %46 = arith.addf %19, %45 : vector<2x1xf32>
    %47 = arith.divf %44, %46 : vector<2x1xf32>
    %48 = arith.mulf %47, %47 : vector<2x1xf32>
    %49 = arith.mulf %48, %19 : vector<2x1xf32>
    %cst_20 = arith.constant 2.000000e+00 : f32
    %50 = vector.broadcast %cst_20 : f32 to vector<2x1xf32>
    %51 = arith.mulf %50, %47 : vector<2x1xf32>
    %52 = arith.mulf %51, %42 : vector<2x1xf32>
    %53 = arith.subf %49, %52 : vector<2x1xf32>
    %54 = arith.addf %53, %9 : vector<2x1xf32>
    %cst_21 = arith.constant 0.000000e+00 : f32
    %55 = vector.broadcast %cst_21 : f32 to vector<2x1xf32>
    %56 = arith.maximumf %54, %55 : vector<2x1xf32>
    %cst_22 = arith.constant 1.1920929E-7 : f32
    %57 = vector.broadcast %cst_22 : f32 to vector<2x1xf32>
    %58 = arith.addf %49, %57 : vector<2x1xf32>
    %cst_23 = arith.constant 1.1920929E-7 : f32
    %59 = vector.broadcast %cst_23 : f32 to vector<2x1xf32>
    %60 = arith.addf %56, %59 : vector<2x1xf32>
    %61 = arith.divf %58, %60 : vector<2x1xf32>
    %62 = math.log %61 : vector<2x1xf32>
    %cst_24 = arith.constant 0.434294492 : f32
    %63 = vector.broadcast %cst_24 : f32 to vector<2x1xf32>
    %64 = arith.mulf %62, %63 : vector<2x1xf32>
    %cst_25 = arith.constant 1.000000e+01 : f32
    %65 = vector.broadcast %cst_25 : f32 to vector<2x1xf32>
    %66 = arith.mulf %65, %64 : vector<2x1xf32>
    %67 = arith.mulf %6, %36 : vector<2x256xf32>
    %cst_26 = arith.constant dense<0.000000e+00> : vector<2xf32>
    %68 = vector.multi_reduction <add>, %67, %cst_26 [1] : vector<2x256xf32> to vector<2xf32>
    %69 = vector.shape_cast %68 : vector<2xf32> to vector<2x1xf32>
    %cst_27 = arith.constant 1.1920929E-7 : f32
    %70 = vector.broadcast %cst_27 : f32 to vector<2x1xf32>
    %71 = arith.addf %69, %70 : vector<2x1xf32>
    %cst_28 = arith.constant 1.1920929E-7 : f32
    %72 = vector.broadcast %cst_28 : f32 to vector<2x1xf32>
    %73 = arith.addf %39, %72 : vector<2x1xf32>
    %74 = arith.divf %71, %73 : vector<2x1xf32>
    %75 = arith.mulf %74, %74 : vector<2x1xf32>
    %76 = arith.mulf %75, %39 : vector<2x1xf32>
    %cst_29 = arith.constant 2.000000e+00 : f32
    %77 = vector.broadcast %cst_29 : f32 to vector<2x1xf32>
    %78 = arith.mulf %77, %74 : vector<2x1xf32>
    %79 = arith.mulf %78, %69 : vector<2x1xf32>
    %80 = arith.subf %76, %79 : vector<2x1xf32>
    %81 = arith.addf %80, %9 : vector<2x1xf32>
    %cst_30 = arith.constant 0.000000e+00 : f32
    %82 = vector.broadcast %cst_30 : f32 to vector<2x1xf32>
    %83 = arith.maximumf %81, %82 : vector<2x1xf32>
    %cst_31 = arith.constant 1.1920929E-7 : f32
    %84 = vector.broadcast %cst_31 : f32 to vector<2x1xf32>
    %85 = arith.addf %76, %84 : vector<2x1xf32>
    %cst_32 = arith.constant 1.1920929E-7 : f32
    %86 = vector.broadcast %cst_32 : f32 to vector<2x1xf32>
    %87 = arith.addf %83, %86 : vector<2x1xf32>
    %88 = arith.divf %85, %87 : vector<2x1xf32>
    %89 = math.log %88 : vector<2x1xf32>
    %cst_33 = arith.constant 0.434294492 : f32
    %90 = vector.broadcast %cst_33 : f32 to vector<2x1xf32>
    %91 = arith.mulf %89, %90 : vector<2x1xf32>
    %cst_34 = arith.constant 1.000000e+01 : f32
    %92 = vector.broadcast %cst_34 : f32 to vector<2x1xf32>
    %93 = arith.mulf %92, %91 : vector<2x1xf32>
    %94 = arith.mulf %26, %16 : vector<2x256xf32>
    %cst_35 = arith.constant dense<0.000000e+00> : vector<2xf32>
    %95 = vector.multi_reduction <add>, %94, %cst_35 [1] : vector<2x256xf32> to vector<2xf32>
    %96 = vector.shape_cast %95 : vector<2xf32> to vector<2x1xf32>
    %cst_36 = arith.constant 1.1920929E-7 : f32
    %97 = vector.broadcast %cst_36 : f32 to vector<2x1xf32>
    %98 = arith.addf %96, %97 : vector<2x1xf32>
    %cst_37 = arith.constant 1.1920929E-7 : f32
    %99 = vector.broadcast %cst_37 : f32 to vector<2x1xf32>
    %100 = arith.addf %19, %99 : vector<2x1xf32>
    %101 = arith.divf %98, %100 : vector<2x1xf32>
    %102 = arith.mulf %101, %101 : vector<2x1xf32>
    %103 = arith.mulf %102, %19 : vector<2x1xf32>
    %cst_38 = arith.constant 2.000000e+00 : f32
    %104 = vector.broadcast %cst_38 : f32 to vector<2x1xf32>
    %105 = arith.mulf %104, %101 : vector<2x1xf32>
    %106 = arith.mulf %105, %96 : vector<2x1xf32>
    %107 = arith.subf %103, %106 : vector<2x1xf32>
    %108 = arith.addf %107, %29 : vector<2x1xf32>
    %cst_39 = arith.constant 0.000000e+00 : f32
    %109 = vector.broadcast %cst_39 : f32 to vector<2x1xf32>
    %110 = arith.maximumf %108, %109 : vector<2x1xf32>
    %cst_40 = arith.constant 1.1920929E-7 : f32
    %111 = vector.broadcast %cst_40 : f32 to vector<2x1xf32>
    %112 = arith.addf %103, %111 : vector<2x1xf32>
    %cst_41 = arith.constant 1.1920929E-7 : f32
    %113 = vector.broadcast %cst_41 : f32 to vector<2x1xf32>
    %114 = arith.addf %110, %113 : vector<2x1xf32>
    %115 = arith.divf %112, %114 : vector<2x1xf32>
    %116 = math.log %115 : vector<2x1xf32>
    %cst_42 = arith.constant 0.434294492 : f32
    %117 = vector.broadcast %cst_42 : f32 to vector<2x1xf32>
    %118 = arith.mulf %116, %117 : vector<2x1xf32>
    %cst_43 = arith.constant 1.000000e+01 : f32
    %119 = vector.broadcast %cst_43 : f32 to vector<2x1xf32>
    %120 = arith.mulf %119, %118 : vector<2x1xf32>
    %121 = arith.mulf %26, %36 : vector<2x256xf32>
    %cst_44 = arith.constant dense<0.000000e+00> : vector<2xf32>
    %122 = vector.multi_reduction <add>, %121, %cst_44 [1] : vector<2x256xf32> to vector<2xf32>
    %123 = vector.shape_cast %122 : vector<2xf32> to vector<2x1xf32>
    %cst_45 = arith.constant 1.1920929E-7 : f32
    %124 = vector.broadcast %cst_45 : f32 to vector<2x1xf32>
    %125 = arith.addf %123, %124 : vector<2x1xf32>
    %cst_46 = arith.constant 1.1920929E-7 : f32
    %126 = vector.broadcast %cst_46 : f32 to vector<2x1xf32>
    %127 = arith.addf %39, %126 : vector<2x1xf32>
    %128 = arith.divf %125, %127 : vector<2x1xf32>
    %129 = arith.mulf %128, %128 : vector<2x1xf32>
    %130 = arith.mulf %129, %39 : vector<2x1xf32>
    %cst_47 = arith.constant 2.000000e+00 : f32
    %131 = vector.broadcast %cst_47 : f32 to vector<2x1xf32>
    %132 = arith.mulf %131, %128 : vector<2x1xf32>
    %133 = arith.mulf %132, %123 : vector<2x1xf32>
    %134 = arith.subf %130, %133 : vector<2x1xf32>
    %135 = arith.addf %134, %29 : vector<2x1xf32>
    %cst_48 = arith.constant 0.000000e+00 : f32
    %136 = vector.broadcast %cst_48 : f32 to vector<2x1xf32>
    %137 = arith.maximumf %135, %136 : vector<2x1xf32>
    %cst_49 = arith.constant 1.1920929E-7 : f32
    %138 = vector.broadcast %cst_49 : f32 to vector<2x1xf32>
    %139 = arith.addf %130, %138 : vector<2x1xf32>
    %cst_50 = arith.constant 1.1920929E-7 : f32
    %140 = vector.broadcast %cst_50 : f32 to vector<2x1xf32>
    %141 = arith.addf %137, %140 : vector<2x1xf32>
    %142 = arith.divf %139, %141 : vector<2x1xf32>
    %143 = math.log %142 : vector<2x1xf32>
    %cst_51 = arith.constant 0.434294492 : f32
    %144 = vector.broadcast %cst_51 : f32 to vector<2x1xf32>
    %145 = arith.mulf %143, %144 : vector<2x1xf32>
    %cst_52 = arith.constant 1.000000e+01 : f32
    %146 = vector.broadcast %cst_52 : f32 to vector<2x1xf32>
    %147 = arith.mulf %146, %145 : vector<2x1xf32>
    %148 = tpu.concatenate %66, %93, %120, %147 in 1 : vector<2x1xf32>, vector<2x1xf32>, vector<2x1xf32>, vector<2x1xf32> -> vector<2x4xf32>
    %c0_53 = arith.constant 0 : index
    %c0_54 = arith.constant 0 : index
    %149 = vector.load %arg3[%c0_53, %c0_54] : memref<2x4xf32, #tpu.memory_space<vmem>>, vector<2x4xf32>
    tpu.vector_store %arg3[%c0_53, %c0_54], %148 {strides = array<i32>} : memref<2x4xf32, #tpu.memory_space<vmem>>, vector<2x4xf32>,
    return
  }
  func.func @transform_0(%arg0: i32) -> (i32, i32) {
    %c0_i32 = arith.constant 0 : i32
    %c0_i32_0 = arith.constant 0 : i32
    return %arg0, %c0_i32 : i32, i32
  }
  func.func @transform_1(%arg0: i32) -> (i32, i32) {
    %c0_i32 = arith.constant 0 : i32
    %c0_i32_0 = arith.constant 0 : i32
    return %arg0, %c0_i32 : i32, i32
  }
  func.func @transform_2(%arg0: i32) -> (i32, i32) {
    %c0_i32 = arith.constant 0 : i32
    %c0_i32_0 = arith.constant 0 : i32
    return %arg0, %c0_i32 : i32, i32
  }
}

</mosaic_0001>

<llo_original>
// kernel: tpu_custom_call.1
$region0: #{tpu_custom_call.1}
  #allocation0 [shape = 'u32[]', space=smem, size = 0x4, offset = 0x4, fixed_abs, tag = 'smem constant byte address 0x4 - core index']
  #allocation1 [shape = 'u32[144,128]{1,0:T(1,128)}', space=vmem, size = 0x12000, scoped, tag = 'internal scratch']
  %s0 = inlined_call_operand.hbm [shape: f32[2,512], index: 0, kind: input, shape index: {}]
  %s1 = inlined_call_operand.hbm [shape: f32[2,512], index: 1, kind: input, shape index: {}]
  %s2 = inlined_call_operand.hbm [shape: f32[2,4], index: 2, kind: output, shape index: {}]
  %s3 = sld [smem:[#allocation0]]
  $region26: #{tpu_custom_call.1} parent=0
    _
  %s5 = ssub.s32 1, %s3
  %s6 = scalar_select 0, %s5, %s3
  $region1: #{tpu_custom_call.1} parent=0
    #allocation2 [shape = 'u8[4096]{0}', space=vmem, size = 0x1000, scoped, tag = 'input window, operand 0, single buffered']
    #allocation3 [shape = 's32[1]{0}', space=sflag, size = 0x4, scoped, tag = 'scoped memory for tpu_custom_call.1']
    #allocation4 [shape = 's32[1]{0}', space=sflag, size = 0x4, scoped, tag = 'scoped memory for tpu_custom_call.1']
    #allocation5 [shape = 'u8[4096]{0}', space=vmem, size = 0x1000, scoped, tag = 'input window, operand 1, single buffered']
    #allocation6 [shape = 's32[1]{0}', space=sflag, size = 0x4, scoped, tag = 'scoped memory for tpu_custom_call.1']
    #allocation7 [shape = 'u8[1024]{0}', space=vmem, size = 0x400, scoped, tag = 'output window, operand 0, single buffered']
    %7 = vsyncpa [#allocation3], 0
    %8 = vsyncpa [#allocation6], 0
    %9 = vsyncpa [#allocation4], 0
    // Predicated region
    $region2: #{tpu_custom_call.1} parent=1 // pred_check
      _
    $region3: #{tpu_custom_call.1} parent=1 // pred_check_branch
      %11 = sbr.rel (0) target = $region5
    $region4: #{tpu_custom_call.1} parent=1 // pred_region
      %s13 = ssub.s32 128, 128
      %14 = vsyncadd [#allocation3], %s13
      %s16 = sshll.u32 [#allocation2], 4
      %s17 = int_to_ptr.vmem [resolvable:$true] %s16
      %19 = dma.hbm_to_vmem [thread:$0]  %s0, 128, %s17, [#allocation3]
    $region5: #{tpu_custom_call.1} parent=1 // pred_fallthru
      _
    // Predicated region
    $region6: #{tpu_custom_call.1} parent=1 // pred_check
      _
    $region7: #{tpu_custom_call.1} parent=1 // pred_check_branch
      %21 = sbr.rel (0) target = $region9
    $region8: #{tpu_custom_call.1} parent=1 // pred_region
      %s23 = ssub.s32 128, 128
      %24 = vsyncadd [#allocation6], %s23
      %s26 = sshll.u32 [#allocation5], 4
      %s27 = int_to_ptr.vmem [resolvable:$true] %s26
      %29 = dma.hbm_to_vmem [thread:$0]  %s1, 128, %s27, [#allocation6]
    $region9: #{tpu_custom_call.1} parent=1 // pred_fallthru
      _
    // Predicated region
    $region10: #{tpu_custom_call.1} parent=1 // pred_check
      _
    $region11: #{tpu_custom_call.1} parent=1 // pred_check_branch
      %31 = sbr.rel (0) target = $region13
    $region12: #{tpu_custom_call.1} parent=1 // pred_region
      %32 = dma.done [#allocation3], 128
    $region13: #{tpu_custom_call.1} parent=1 // pred_fallthru
      _
    // Predicated region
    $region14: #{tpu_custom_call.1} parent=1 // pred_check
      _
    $region15: #{tpu_custom_call.1} parent=1 // pred_check_branch
      %34 = sbr.rel (0) target = $region17
    $region16: #{tpu_custom_call.1} parent=1 // pred_region
      %35 = dma.done [#allocation6], 128
    $region17: #{tpu_custom_call.1} parent=1 // pred_fallthru
      _
    %v36 = vld [vmem:[#allocation2] sm:$0xf]
    %v39 = vunpack.c.l.s4 1983009808
    %v40 = vunpack.c.0.s8 %v39
    %v41 = vlaneseq
    %v42 = vshrl.u32 %v41, 7
    %v43 = vsub.s32 %v40, %v42
    %v44 = vrot.slane %v36, %v43
    %v45 = vcombine.high %v44, %v44
    %vm48 = vcmask 1041408
    %v49 = vsel %vm48, %v44, 0.0
    %v50 = vsel %vm48, %v45, 0.0
    %v51 = vadd.f32 %v49, %v50
    %52 = vadd.xlane.f32.xlu0 %v51
    %v53 = vpop.xlane.xlu0 %52
    %v54 = vrcp.pop 256.0
    %v55 = vmul.f32 %v53, %v54
    %v58 = vunpack.c.l.s4 269488144
    %v59 = vunpack.c.0.s8 %v58
    %v60 = vlaneseq
    %v61 = vshrl.u32 %v60, 7
    %v62 = vsub.s32 %v59, %v61
    %v63 = vrot.slane %v55, %v62
    %v65 = vsub.f32 %v36, %v63
    %v66 = vmul.f32 %v65, %v65
    %v69 = vunpack.c.l.s4 1983009808
    %v70 = vunpack.c.0.s8 %v69
    %v71 = vlaneseq
    %v72 = vshrl.u32 %v71, 7
    %v73 = vsub.s32 %v70, %v72
    %v74 = vrot.slane %v66, %v73
    %v75 = vcombine.high %v74, %v74
    %v78 = vsel %vm48, %v74, 0.0
    %v79 = vsel %vm48, %v75, 0.0
    %v80 = vadd.f32 %v78, %v79
    %81 = vadd.xlane.f32.xlu0 %v80
    %v82 = vpop.xlane.xlu0 %81
    %v83 = vld [vmem:[#allocation5] sm:$0xf]
    %v86 = vunpack.c.l.s4 1983009808
    %v87 = vunpack.c.0.s8 %v86
    %v88 = vlaneseq
    %v89 = vshrl.u32 %v88, 7
    %v90 = vsub.s32 %v87, %v89
    %v91 = vrot.slane %v83, %v90
    %v92 = vcombine.high %v91, %v91
    %v95 = vsel %vm48, %v91, 0.0
    %v96 = vsel %vm48, %v92, 0.0
    %v97 = vadd.f32 %v95, %v96
    %98 = vadd.xlane.f32.xlu0 %v97
    %v99 = vpop.xlane.xlu0 %98
    %v100 = vmul.f32 %v99, %v54
    %v103 = vunpack.c.l.s4 269488144
    %v104 = vunpack.c.0.s8 %v103
    %v105 = vlaneseq
    %v106 = vshrl.u32 %v105, 7
    %v107 = vsub.s32 %v104, %v106
    %v108 = vrot.slane %v100, %v107
    %v110 = vsub.f32 %v83, %v108
    %v111 = vmul.f32 %v110, %v110
    %v114 = vunpack.c.l.s4 1983009808
    %v115 = vunpack.c.0.s8 %v114
    %v116 = vlaneseq
    %v117 = vshrl.u32 %v116, 7
    %v118 = vsub.s32 %v115, %v117
    %v119 = vrot.slane %v111, %v118
    %v120 = vcombine.high %v119, %v119
    %v123 = vsel %vm48, %v119, 0.0
    %v124 = vsel %vm48, %v120, 0.0
    %v125 = vadd.f32 %v123, %v124
    %126 = vadd.xlane.f32.xlu0 %v125
    %v127 = vpop.xlane.xlu0 %126
    %v128 = vld [vmem:[#allocation2 + $0x4] sm:$0xf]
    %v131 = vunpack.c.l.s4 1983009808
    %v132 = vunpack.c.0.s8 %v131
    %v133 = vlaneseq
    %v134 = vshrl.u32 %v133, 7
    %v135 = vsub.s32 %v132, %v134
    %v136 = vrot.slane %v128, %v135
    %v137 = vcombine.high %v136, %v136
    %v140 = vsel %vm48, %v136, 0.0
    %v141 = vsel %vm48, %v137, 0.0
    %v142 = vadd.f32 %v140, %v141
    %143 = vadd.xlane.f32.xlu0 %v142
    %v144 = vpop.xlane.xlu0 %143
    %v145 = vmul.f32 %v144, %v54
    %v148 = vunpack.c.l.s4 269488144
    %v149 = vunpack.c.0.s8 %v148
    %v150 = vlaneseq
    %v151 = vshrl.u32 %v150, 7
    %v152 = vsub.s32 %v149, %v151
    %v153 = vrot.slane %v145, %v152
    %v155 = vsub.f32 %v128, %v153
    %v156 = vmul.f32 %v155, %v155
    %v159 = vunpack.c.l.s4 1983009808
    %v160 = vunpack.c.0.s8 %v159
    %v161 = vlaneseq
    %v162 = vshrl.u32 %v161, 7
    %v163 = vsub.s32 %v160, %v162
    %v164 = vrot.slane %v156, %v163
    %v165 = vcombine.high %v164, %v164
    %v168 = vsel %vm48, %v164, 0.0
    %v169 = vsel %vm48, %v165, 0.0
    %v170 = vadd.f32 %v168, %v169
    %171 = vadd.xlane.f32.xlu0 %v170
    %v172 = vpop.xlane.xlu0 %171
    %v173 = vld [vmem:[#allocation5 + $0x4] sm:$0xf]
    %v176 = vunpack.c.l.s4 1983009808
    %v177 = vunpack.c.0.s8 %v176
    %v178 = vlaneseq
    %v179 = vshrl.u32 %v178, 7
    %v180 = vsub.s32 %v177, %v179
    %v181 = vrot.slane %v173, %v180
    %v182 = vcombine.high %v181, %v181
    %v185 = vsel %vm48, %v181, 0.0
    %v186 = vsel %vm48, %v182, 0.0
    %v187 = vadd.f32 %v185, %v186
    %188 = vadd.xlane.f32.xlu0 %v187
    %v189 = vpop.xlane.xlu0 %188
    %v190 = vmul.f32 %v189, %v54
    %v193 = vunpack.c.l.s4 269488144
    %v194 = vunpack.c.0.s8 %v193
    %v195 = vlaneseq
    %v196 = vshrl.u32 %v195, 7
    %v197 = vsub.s32 %v194, %v196
    %v198 = vrot.slane %v190, %v197
    %v200 = vsub.f32 %v173, %v198
    %v201 = vmul.f32 %v200, %v200
    %v204 = vunpack.c.l.s4 1983009808
    %v205 = vunpack.c.0.s8 %v204
    %v206 = vlaneseq
    %v207 = vshrl.u32 %v206, 7
    %v208 = vsub.s32 %v205, %v207
    %v209 = vrot.slane %v201, %v208
    %v210 = vcombine.high %v209, %v209
    %v213 = vsel %vm48, %v209, 0.0
    %v214 = vsel %vm48, %v210, 0.0
    %v215 = vadd.f32 %v213, %v214
    %216 = vadd.xlane.f32.xlu0 %v215
    %v217 = vpop.xlane.xlu0 %216
    %v218 = vmul.f32 %v65, %v110
    %v221 = vunpack.c.l.s4 1983009808
    %v222 = vunpack.c.0.s8 %v221
    %v223 = vlaneseq
    %v224 = vshrl.u32 %v223, 7
    %v225 = vsub.s32 %v222, %v224
    %v226 = vrot.slane %v218, %v225
    %v227 = vcombine.high %v226, %v226
    %v230 = vsel %vm48, %v226, 0.0
    %v231 = vsel %vm48, %v227, 0.0
    %v232 = vadd.f32 %v230, %v231
    %233 = vadd.xlane.f32.xlu0 %v232
    %v234 = vpop.xlane.xlu0 %233
    %v235 = vadd.f32 %v234, 1.1920929e-07
    %v236 = vadd.f32 %v127, 1.1920929e-07
    %v237 = vrcp.pop %v236
    %v238 = vmul.f32 %v235, %v237
    %v239 = vmul.f32 %v238, %v238
    %v240 = vmul.f32 %v239, %v127
    %v241 = vmul.f32 %v238, 2.0
    %v242 = vmul.f32 %v241, %v234
    %v243 = vsub.f32 %v240, %v242
    %v244 = vadd.f32 %v243, %v82
    %v245 = vmax.f32 %v244, 0.0
    %v246 = vadd.f32 %v240, 1.1920929e-07
    %v247 = vadd.f32 %v245, 1.1920929e-07
    %v248 = vrcp.pop %v247
    %v249 = vmul.f32 %v246, %v248
    %v250 = vlog2.pop %v249
    %v251 = vmul.f32 %v250, 0.6931472
    %v252 = vmul.f32 %v251, 0.4342945
    %v253 = vmul.f32 %v252, 10.0
    %v254 = vmul.f32 %v65, %v200
    %v257 = vunpack.c.l.s4 1983009808
    %v258 = vunpack.c.0.s8 %v257
    %v259 = vlaneseq
    %v260 = vshrl.u32 %v259, 7
    %v261 = vsub.s32 %v258, %v260
    %v262 = vrot.slane %v254, %v261
    %v263 = vcombine.high %v262, %v262
    %v266 = vsel %vm48, %v262, 0.0
    %v267 = vsel %vm48, %v263, 0.0
    %v268 = vadd.f32 %v266, %v267
    %269 = vadd.xlane.f32.xlu0 %v268
    %v270 = vpop.xlane.xlu0 %269
    %v271 = vadd.f32 %v270, 1.1920929e-07
    %v272 = vadd.f32 %v217, 1.1920929e-07
    %v273 = vrcp.pop %v272
    %v274 = vmul.f32 %v271, %v273
    %v275 = vmul.f32 %v274, %v274
    %v276 = vmul.f32 %v275, %v217
    %v277 = vmul.f32 %v274, 2.0
    %v278 = vmul.f32 %v277, %v270
    %v279 = vsub.f32 %v276, %v278
    %v280 = vadd.f32 %v279, %v82
    %v281 = vmax.f32 %v280, 0.0
    %v282 = vadd.f32 %v276, 1.1920929e-07
    %v283 = vadd.f32 %v281, 1.1920929e-07
    %v284 = vrcp.pop %v283
    %v285 = vmul.f32 %v282, %v284
    %v286 = vlog2.pop %v285
    %v287 = vmul.f32 %v286, 0.6931472
    %v288 = vmul.f32 %v287, 0.4342945
    %v289 = vmul.f32 %v288, 10.0
    %v290 = vmul.f32 %v155, %v110
    %v293 = vunpack.c.l.s4 1983009808
    %v294 = vunpack.c.0.s8 %v293
    %v295 = vlaneseq
    %v296 = vshrl.u32 %v295, 7
    %v297 = vsub.s32 %v294, %v296
    %v298 = vrot.slane %v290, %v297
    %v299 = vcombine.high %v298, %v298
    %v302 = vsel %vm48, %v298, 0.0
    %v303 = vsel %vm48, %v299, 0.0
    %v304 = vadd.f32 %v302, %v303
    %305 = vadd.xlane.f32.xlu0 %v304
    %v306 = vpop.xlane.xlu0 %305
    %v307 = vadd.f32 %v306, 1.1920929e-07
    %v308 = vmul.f32 %v307, %v237
    %v309 = vmul.f32 %v308, %v308
    %v310 = vmul.f32 %v309, %v127
    %v311 = vmul.f32 %v308, 2.0
    %v312 = vmul.f32 %v311, %v306
    %v313 = vsub.f32 %v310, %v312
    %v314 = vadd.f32 %v313, %v172
    %v315 = vmax.f32 %v314, 0.0
    %v316 = vadd.f32 %v310, 1.1920929e-07
    %v317 = vadd.f32 %v315, 1.1920929e-07
    %v318 = vrcp.pop %v317
    %v319 = vmul.f32 %v316, %v318
    %v320 = vlog2.pop %v319
    %v321 = vmul.f32 %v320, 0.6931472
    %v322 = vmul.f32 %v321, 0.4342945
    %v323 = vmul.f32 %v322, 10.0
    %v324 = vmul.f32 %v155, %v200
    %v327 = vunpack.c.l.s4 1983009808
    %v328 = vunpack.c.0.s8 %v327
    %v329 = vlaneseq
    %v330 = vshrl.u32 %v329, 7
    %v331 = vsub.s32 %v328, %v330
    %v332 = vrot.slane %v324, %v331
    %v333 = vcombine.high %v332, %v332
    %v336 = vsel %vm48, %v332, 0.0
    %v337 = vsel %vm48, %v333, 0.0
    %v338 = vadd.f32 %v336, %v337
    %339 = vadd.xlane.f32.xlu0 %v338
    %v340 = vpop.xlane.xlu0 %339
    %v341 = vadd.f32 %v340, 1.1920929e-07
    %v342 = vmul.f32 %v341, %v273
    %v343 = vmul.f32 %v342, %v342
    %v344 = vmul.f32 %v343, %v217
    %v345 = vmul.f32 %v342, 2.0
    %v346 = vmul.f32 %v345, %v340
    %v347 = vsub.f32 %v344, %v346
    %v348 = vadd.f32 %v347, %v172
    %v349 = vmax.f32 %v348, 0.0
    %v350 = vadd.f32 %v344, 1.1920929e-07
    %v351 = vadd.f32 %v349, 1.1920929e-07
    %v352 = vrcp.pop %v351
    %v353 = vmul.f32 %v350, %v352
    %v354 = vlog2.pop %v353
    %v355 = vmul.f32 %v354, 0.6931472
    %v356 = vmul.f32 %v355, 0.4342945
    %v357 = vmul.f32 %v356, 10.0
    %vm358 = vcmask 7168
    %v359 = vsel %vm358, %v253, %v289
    %vm360 = vcmask 15360
    %v361 = vsel %vm360, %v359, %v323
    %vm362 = vcmask 23552
    %v363 = vsel %vm362, %v361, %v357
    %vm364 = vcmask 25600
    %365 = vst.msk [vmem:[#allocation7] sm:$0x3] %vm364, %v363
    // Predicated region
    $region18: #{tpu_custom_call.1} parent=1 // pred_check
      _
    $region19: #{tpu_custom_call.1} parent=1 // pred_check_branch
      %367 = sbr.rel (0) target = $region21
    $region20: #{tpu_custom_call.1} parent=1 // pred_region
      %s369 = ssub.s32 32, 32
      %370 = vsyncadd [#allocation4], %s369
      %s372 = sshll.u32 [#allocation7], 4
      %s373 = int_to_ptr.vmem [resolvable:$true] %s372
      %375 = dma.vmem_to_hbm [thread:$0]  %s373, 32, %s2, [#allocation4]
    $region21: #{tpu_custom_call.1} parent=1 // pred_fallthru
      _
    // Predicated region
    $region22: #{tpu_custom_call.1} parent=1 // pred_check
      _
    $region23: #{tpu_custom_call.1} parent=1 // pred_check_branch
      %377 = sbr.rel (0) target = $region25
    $region24: #{tpu_custom_call.1} parent=1 // pred_region
      %378 = dma.done [#allocation4], 32
    $region25: #{tpu_custom_call.1} parent=1 // pred_fallthru
      _
    %379 = vsyncpa [#allocation3], 1
    %380 = vsyncpa [#allocation6], 1
    %381 = vsyncpa [#allocation4], 1

</llo_original>
